<compile_context>
chip_gen: v7x
topology: tpu7x:2x2x1
jax: 0.10.0
libtpu: 0.0.40
codegen_flags: <defaults>
</compile_context>

<pallas_src>
import functools

import jax
import jax.numpy as jnp
from jax.experimental import pallas as pl
from jax.experimental.pallas import tpu as pltpu


def _round_up(n, m):
    return ((n + m - 1) // m) * m


def _kernel(x_ref, w1_ref, b1_ref, w2_ref, b2_ref, logp_ref, logits_ref):
    # fc1 + ReLU (f32 operands, f32 MXU accumulation; K is tiny so f32 is free).
    h = jnp.dot(x_ref[...], w1_ref[...], preferred_element_type=jnp.float32)
    h = jnp.maximum(h + b1_ref[...], 0.0)

    # fc2 ("embedding" / logits).  No class padding -> no masking needed.
    logits = (jnp.dot(h, w2_ref[...], preferred_element_type=jnp.float32)
              + b2_ref[...])

    # Numerically stable LogSoftmax over the class axis.
    m = jnp.max(logits, axis=-1, keepdims=True)
    shifted = logits - m
    lse = jnp.log(jnp.sum(jnp.exp(shifted), axis=-1, keepdims=True))

    logp_ref[...] = shifted - lse
    logits_ref[...] = logits


@functools.partial(jax.jit, static_argnames=("block_b",))
def ood_mlp_forward(x, w1, b1, w2, b2, *, block_b=2048):
    """x: [B, x_dim]; w1: [x_dim, embed]; b1: [1, embed];
       w2: [embed, n_class]; b2: [1, n_class].
       Returns (log_softmax_probs [B, n_class], logits [B, n_class]), both f32."""
    B, x_dim = x.shape
    embed = w1.shape[1]
    n_class = w2.shape[1]

    # Batch tile: multiple of 8 sublanes, capped at half the rounded batch so the
    # "parallel" batch axis always has >= 2 grid steps (v7x dual-TC sharding).
    b8 = _round_up(B, 8)
    half = max(8, (b8 // 2) // 8 * 8)
    tb = max(8, min(_round_up(int(block_b), 8), half, b8))
    b_pad = _round_up(B, tb)

    if b_pad != B:
        x = jnp.pad(x, ((0, b_pad - B), (0, 0)))

    # f32 everywhere: no standalone wrapper converts, no in-kernel repacking.
    x = x.astype(jnp.float32)
    w1 = w1.astype(jnp.float32)
    b1 = b1.astype(jnp.float32)
    w2 = w2.astype(jnp.float32)
    b2 = b2.astype(jnp.float32)

    grid = (b_pad // tb,)

    # Explicit VMEM budget: double-buffered x tile + 2 double-buffered output
    # tiles (lane-padded layout in VMEM) + resident weights, with 2x headroom,
    # capped well under v7x's 64 MiB physical VMEM.
    lane = 128
    est = 4 * (
        2 * tb * _round_up(x_dim, lane)                 # x tile, double-buffered
        + 2 * 2 * tb * _round_up(n_class, lane)         # two outputs, double-buffered
        + _round_up(x_dim, 8) * _round_up(embed, lane)  # w1 (resident)
        + _round_up(embed, 8) * _round_up(n_class, lane)  # w2 (resident)
        + 2 * 8 * lane                                  # biases (resident)
    )
    vmem_limit = int(min(max(2 * est, 8 << 20), 48 << 20))

    logp, logits = pl.pallas_call(
        _kernel,
        out_shape=(
            jax.ShapeDtypeStruct((b_pad, n_class), jnp.float32),
            jax.ShapeDtypeStruct((b_pad, n_class), jnp.float32),
        ),
        grid=grid,
        in_specs=[
            pl.BlockSpec((tb, x_dim), lambda i: (i, 0)),       # batch tile of x
            pl.BlockSpec((x_dim, embed), lambda i: (0, 0)),    # full w1, resident
            pl.BlockSpec((1, embed), lambda i: (0, 0)),        # b1 row
            pl.BlockSpec((embed, n_class), lambda i: (0, 0)),  # full w2, resident
            pl.BlockSpec((1, n_class), lambda i: (0, 0)),      # b2 row
        ],
        out_specs=(
            pl.BlockSpec((tb, n_class), lambda i: (i, 0)),
            pl.BlockSpec((tb, n_class), lambda i: (i, 0)),
        ),
        compiler_params=pltpu.CompilerParams(
            dimension_semantics=("parallel",),
            vmem_limit_bytes=vmem_limit,
        ),
    )(x, w1, b1, w2, b2)

    if b_pad != B:
        logp = logp[:B]
        logits = logits[:B]
    return logp, logits


def make_params(key, x_dim, embed_size, n_class):
    """Deterministic synthetic parameters (PyTorch Linear-like uniform init),
       stored pre-transposed as (in_features, out_features)."""
    k1, k2, k3, k4 = jax.random.split(key, 4)
    bound1 = 1.0 / (x_dim ** 0.5)
    bound2 = 1.0 / (embed_size ** 0.5)
    w1 = jax.random.uniform(k1, (x_dim, embed_size), jnp.float32, -bound1, bound1)
    b1 = jax.random.uniform(k2, (1, embed_size), jnp.float32, -bound1, bound1)
    w2 = jax.random.uniform(k3, (embed_size, n_class), jnp.float32, -bound2, bound2)
    b2 = jax.random.uniform(k4, (1, n_class), jnp.float32, -bound2, bound2)
    return w1, b1, w2, b2


if __name__ == "__main__":
    # Shapes consistent with the module (opt.x_dim, opt.ood_embedSize,
    # opt.n_class_seen); batch large enough to exercise the batch grid (2 steps).
    B, X_DIM, EMBED, N_CLASS = 256, 32, 32, 16

    key = jax.random.PRNGKey(0)
    kx, kp = jax.random.split(key)
    x = jax.random.normal(kx, (B, X_DIM), jnp.float32)
    w1, b1, w2, b2 = make_params(kp, X_DIM, EMBED, N_CLASS)

    log_probs, embedding = ood_mlp_forward(x, w1, b1, w2, b2, block_b=128)
    jax.block_until_ready((log_probs, embedding))

    assert log_probs.shape == (B, N_CLASS) and embedding.shape == (B, N_CLASS)
    assert log_probs.dtype == jnp.float32 and embedding.dtype == jnp.float32

    # Pure-f32 PyTorch-equivalent reference (tolerance covers MXU/XLA
    # default-precision differences on f32 matmuls).
    h_ref = jnp.maximum(x @ w1 + b1, 0.0)
    logits_ref = h_ref @ w2 + b2
    logp_ref = jax.nn.log_softmax(logits_ref, axis=1)
    assert jnp.allclose(embedding, logits_ref, atol=2e-2, rtol=2e-2)
    assert jnp.allclose(log_probs, logp_ref, atol=2e-2, rtol=2e-2)

    # Log-softmax sanity: probabilities sum to 1 per row.
    assert jnp.allclose(jnp.sum(jnp.exp(log_probs), axis=1), 1.0, atol=1e-3)

    print("KERNEL_OK")
</pallas_src>

<mosaic_0001>
module attributes {stable_mosaic.version = 11 : i64} {
  func.func @_kernel(%arg0: i32, %arg1: memref<128x32xf32, #tpu.memory_space<vmem>>, %arg2: memref<32x32xf32, #tpu.memory_space<vmem>>, %arg3: memref<1x32xf32, #tpu.memory_space<vmem>>, %arg4: memref<32x16xf32, #tpu.memory_space<vmem>>, %arg5: memref<1x16xf32, #tpu.memory_space<vmem>>, %arg6: memref<128x16xf32, #tpu.memory_space<vmem>>, %arg7: memref<128x16xf32, #tpu.memory_space<vmem>>) attributes {dimension_semantics = [#tpu.dimension_semantics<parallel>], iteration_bounds = array<i64: 2>, scalar_prefetch = 0 : i64, scratch_operands = 0 : i64, tpu.core_type = #tpu.core_type<tc>, window_params = [{transform_indices = @transform_0, window_bounds = array<i64: 128, 32>}, {pipeline_mode = #tpu.pipeline_mode<synchronous>, transform_indices = @transform_1, window_bounds = array<i64: 32, 32>}, {pipeline_mode = #tpu.pipeline_mode<synchronous>, transform_indices = @transform_2, window_bounds = array<i64: 1, 32>}, {pipeline_mode = #tpu.pipeline_mode<synchronous>, transform_indices = @transform_3, window_bounds = array<i64: 32, 16>}, {pipeline_mode = #tpu.pipeline_mode<synchronous>, transform_indices = @transform_4, window_bounds = array<i64: 1, 16>}, {transform_indices = @transform_5, window_bounds = array<i64: 128, 16>}, {transform_indices = @transform_6, window_bounds = array<i64: 128, 16>}]} {
    %c0 = arith.constant 0 : index
    %c0_0 = arith.constant 0 : index
    %0 = vector.load %arg1[%c0, %c0_0] : memref<128x32xf32, #tpu.memory_space<vmem>>, vector<128x32xf32>
    %c0_1 = arith.constant 0 : index
    %c0_2 = arith.constant 0 : index
    %1 = vector.load %arg2[%c0_1, %c0_2] : memref<32x32xf32, #tpu.memory_space<vmem>>, vector<32x32xf32>
    %cst = arith.constant dense<0.000000e+00> : vector<128x32xf32>
    %2 = tpu.matmul %0, %1, %cst {dimension_numbers = #tpu.dot_dimension_numbers<[1], [0], [0], [1], [0, 0, 1, 1], [], []>} : vector<128x32xf32>, vector<32x32xf32>, vector<128x32xf32> -> vector<128x32xf32>
    %c0_3 = arith.constant 0 : index
    %c0_4 = arith.constant 0 : index
    %3 = vector.load %arg3[%c0_3, %c0_4] : memref<1x32xf32, #tpu.memory_space<vmem>>, vector<1x32xf32>
    %4 = vector.broadcast %3 : vector<1x32xf32> to vector<128x32xf32>
    %5 = arith.addf %2, %4 : vector<128x32xf32>
    %cst_5 = arith.constant 0.000000e+00 : f32
    %6 = vector.broadcast %cst_5 : f32 to vector<128x32xf32>
    %7 = arith.maximumf %5, %6 : vector<128x32xf32>
    %c0_6 = arith.constant 0 : index
    %c0_7 = arith.constant 0 : index
    %8 = vector.load %arg4[%c0_6, %c0_7] : memref<32x16xf32, #tpu.memory_space<vmem>>, vector<32x16xf32>
    %cst_8 = arith.constant dense<0.000000e+00> : vector<128x16xf32>
    %9 = tpu.matmul %7, %8, %cst_8 {dimension_numbers = #tpu.dot_dimension_numbers<[1], [0], [0], [1], [0, 0, 1, 1], [], []>} : vector<128x32xf32>, vector<32x16xf32>, vector<128x16xf32> -> vector<128x16xf32>
    %c0_9 = arith.constant 0 : index
    %c0_10 = arith.constant 0 : index
    %10 = vector.load %arg5[%c0_9, %c0_10] : memref<1x16xf32, #tpu.memory_space<vmem>>, vector<1x16xf32>
    %11 = vector.broadcast %10 : vector<1x16xf32> to vector<128x16xf32>
    %12 = arith.addf %9, %11 : vector<128x16xf32>
    %cst_11 = arith.constant dense<0xFF800000> : vector<128xf32>
    %13 = vector.multi_reduction <maximumf>, %12, %cst_11 [1] : vector<128x16xf32> to vector<128xf32>
    %14 = vector.shape_cast %13 : vector<128xf32> to vector<128x1xf32>
    %15 = vector.broadcast %14 : vector<128x1xf32> to vector<128x16xf32>
    %16 = arith.subf %12, %15 : vector<128x16xf32>
    %17 = math.exp %16 : vector<128x16xf32>
    %cst_12 = arith.constant dense<0.000000e+00> : vector<128xf32>
    %18 = vector.multi_reduction <add>, %17, %cst_12 [1] : vector<128x16xf32> to vector<128xf32>
    %19 = vector.shape_cast %18 : vector<128xf32> to vector<128x1xf32>
    %20 = math.log %19 : vector<128x1xf32>
    %21 = vector.broadcast %20 : vector<128x1xf32> to vector<128x16xf32>
    %22 = arith.subf %16, %21 : vector<128x16xf32>
    %c0_13 = arith.constant 0 : index
    %c0_14 = arith.constant 0 : index
    %23 = vector.load %arg6[%c0_13, %c0_14] : memref<128x16xf32, #tpu.memory_space<vmem>>, vector<128x16xf32>
    tpu.vector_store %arg6[%c0_13, %c0_14], %22 {strides = array<i32>} : memref<128x16xf32, #tpu.memory_space<vmem>>, vector<128x16xf32>,
    %c0_15 = arith.constant 0 : index
    %c0_16 = arith.constant 0 : index
    %24 = vector.load %arg7[%c0_15, %c0_16] : memref<128x16xf32, #tpu.memory_space<vmem>>, vector<128x16xf32>
    tpu.vector_store %arg7[%c0_15, %c0_16], %12 {strides = array<i32>} : memref<128x16xf32, #tpu.memory_space<vmem>>, vector<128x16xf32>,
    return
  }
  func.func @transform_0(%arg0: i32) -> (i32, i32) {
    %c0_i32 = arith.constant 0 : i32
    %c0_i32_0 = arith.constant 0 : i32
    return %arg0, %c0_i32 : i32, i32
  }
  func.func @transform_1(%arg0: i32) -> (i32, i32) {
    %c0_i32 = arith.constant 0 : i32
    %c0_i32_0 = arith.constant 0 : i32
    %c0_i32_1 = arith.constant 0 : i32
    return %c0_i32, %c0_i32_0 : i32, i32
  }
  func.func @transform_2(%arg0: i32) -> (i32, i32) {
    %c0_i32 = arith.constant 0 : i32
    %c0_i32_0 = arith.constant 0 : i32
    %c0_i32_1 = arith.constant 0 : i32
    return %c0_i32, %c0_i32_0 : i32, i32
  }
  func.func @transform_3(%arg0: i32) -> (i32, i32) {
    %c0_i32 = arith.constant 0 : i32
    %c0_i32_0 = arith.constant 0 : i32
    %c0_i32_1 = arith.constant 0 : i32
    return %c0_i32, %c0_i32_0 : i32, i32
  }
  func.func @transform_4(%arg0: i32) -> (i32, i32) {
    %c0_i32 = arith.constant 0 : i32
    %c0_i32_0 = arith.constant 0 : i32
    %c0_i32_1 = arith.constant 0 : i32
    return %c0_i32, %c0_i32_0 : i32, i32
  }
  func.func @transform_5(%arg0: i32) -> (i32, i32) {
    %c0_i32 = arith.constant 0 : i32
    %c0_i32_0 = arith.constant 0 : i32
    return %arg0, %c0_i32 : i32, i32
  }
  func.func @transform_6(%arg0: i32) -> (i32, i32) {
    %c0_i32 = arith.constant 0 : i32
    %c0_i32_0 = arith.constant 0 : i32
    return %arg0, %c0_i32 : i32, i32
  }
}

</mosaic_0001>

<llo_original>
// kernel: ood_mlp_forward.1
$region0: #{ood_mlp_forward.1}
  #allocation0 [shape = 'u32[]', space=smem, size = 0x4, offset = 0x4, fixed_abs, tag = 'smem constant byte address 0x4 - core index']
  #allocation1 [shape = 'u32[144,128]{1,0:T(1,128)}', space=vmem, size = 0x12000, scoped, tag = 'internal scratch']
  %s0 = inlined_call_operand.vmem [shape: f32[256,32], index: 0, kind: input, shape index: {}]
  %s1 = inlined_call_operand.vmem [shape: f32[32,32], index: 1, kind: input, shape index: {}]
  %s2 = inlined_call_operand.vmem [shape: f32[1,32], index: 2, kind: input, shape index: {}]
  %s3 = inlined_call_operand.vmem [shape: f32[32,16], index: 3, kind: input, shape index: {}]
  %s4 = inlined_call_operand.vmem [shape: f32[1,16], index: 4, kind: input, shape index: {}]
  %s5 = inlined_call_operand.vmem [shape: f32[256,16], index: 5, kind: output, shape index: {0}]
  %s6 = inlined_call_operand.vmem [shape: f32[256,16], index: 6, kind: output, shape index: {1}]
  %7 = xla_tuple %s5, %s6
  %s8 = sld [smem:[#allocation0]]
  $region61: #{ood_mlp_forward.1} parent=0
    _
  %s10 = ssub.s32 1, %s8
  %s11 = scalar_select 0, %s10, %s8
  loop: start=0, step=1, limit=4
  $region2: #{ood_mlp_forward.1} parent=0 // loop_pre_header
    _
  $region3: #{ood_mlp_forward.1} parent=0 // loop_header
    %s13 = sphi 0, %s17
    %p14 = scmp.ge.s32.totalorder %s13, 4
    %s23 = sphi 0, %s25
    %s26 = sphi 0, %s23
    %s27 = sphi 0, %s26
    %s43 = sphi 0, %s27
    %s47 = sphi 0, %s47
    %s49 = sphi 0, %s47
    %s50 = sphi 0, %s49
    %s64 = sphi 0, %s50
    %s68 = sphi 0, %s68
    %s70 = sphi 0, %s68
    %s71 = sphi 0, %s70
    %s85 = sphi 0, %s71
    %s89 = sphi 0, %s89
    %s91 = sphi 0, %s89
    %s92 = sphi 0, %s91
    %s106 = sphi 0, %s92
    %s110 = sphi 0, %s110
    %s112 = sphi 0, %s110
    %s113 = sphi 0, %s112
    %s127 = sphi 0, %s113
    %s133 = sphi 0, %s135
    %s136 = sphi 0, %s133
    %s137 = sphi 0, %s136
    %s153 = sphi 0, %s137
    %s159 = sphi 0, %s161
    %s162 = sphi 0, %s159
    %s163 = sphi 0, %s162
    %s179 = sphi 0, %s163
  $region4: #{ood_mlp_forward.1} parent=0 // loop_header_branch
    %16 = sbr.rel (%p14) target = $region8
  $region5: #{ood_mlp_forward.1} parent=0 // loop_body
    %s18 = ssub.s32 %s13, 1
    %s19 = ssub.s32 %s13, 2
    %s20 = sadd.s32 %s13, 1
    %s21 = ssub.s32 %s13, %s20
    %p22 = scmp.eq.s32.totalorder %s21, 0
    %s24 = sadd.s32 %s23, 1
    %s25 = scalar_select %p22, %s23, %s24
    %p28 = pneg %p22
    %p29 = scmp.eq.s32.totalorder %s13, 1
    %p30 = por %p28, %p29
    %p31 = scmp.ne.s32.totalorder %s23, %s26
    %p32 = scmp.eq.s32.totalorder %s13, 0
    %p33 = por %p31, %p32
    %p34 = scmp.ne.s32.totalorder %s23, %s26
    %p35 = scmp.eq.s32.totalorder %s18, 1
    %p36 = por %p34, %p35
    %p37 = scmp.ne.s32.totalorder %s26, %s27
    %p38 = scmp.eq.s32.totalorder %s18, 0
    %p39 = por %p37, %p38
    %p40 = scmp.ne.s32.totalorder %s26, %s27
    %p41 = scmp.eq.s32.totalorder %s19, 1
    %p42 = por %p40, %p41
    %p44 = scmp.ne.s32.totalorder %s27, %s43
    %p45 = scmp.eq.s32.totalorder %s19, 0
    %p46 = por %p44, %p45
    %s48 = sadd.s32 %s47, 1
    %p51 = scmp.eq.s32.totalorder %s13, 1
    %p52 = scmp.ne.s32.totalorder %s47, %s49
    %p53 = scmp.eq.s32.totalorder %s13, 0
    %p54 = por %p52, %p53
    %p55 = scmp.ne.s32.totalorder %s47, %s49
    %p56 = scmp.eq.s32.totalorder %s18, 1
    %p57 = por %p55, %p56
    %p58 = scmp.ne.s32.totalorder %s49, %s50
    %p59 = scmp.eq.s32.totalorder %s18, 0
    %p60 = por %p58, %p59
    %p61 = scmp.ne.s32.totalorder %s49, %s50
    %p62 = scmp.eq.s32.totalorder %s19, 1
    %p63 = por %p61, %p62
    %p65 = scmp.ne.s32.totalorder %s50, %s64
    %p66 = scmp.eq.s32.totalorder %s19, 0
    %p67 = por %p65, %p66
    %s69 = sadd.s32 %s68, 1
    %p72 = scmp.eq.s32.totalorder %s13, 1
    %p73 = scmp.ne.s32.totalorder %s68, %s70
    %p74 = scmp.eq.s32.totalorder %s13, 0
    %p75 = por %p73, %p74
    %p76 = scmp.ne.s32.totalorder %s68, %s70
    %p77 = scmp.eq.s32.totalorder %s18, 1
    %p78 = por %p76, %p77
    %p79 = scmp.ne.s32.totalorder %s70, %s71
    %p80 = scmp.eq.s32.totalorder %s18, 0
    %p81 = por %p79, %p80
    %p82 = scmp.ne.s32.totalorder %s70, %s71
    %p83 = scmp.eq.s32.totalorder %s19, 1
    %p84 = por %p82, %p83
    %p86 = scmp.ne.s32.totalorder %s71, %s85
    %p87 = scmp.eq.s32.totalorder %s19, 0
    %p88 = por %p86, %p87
    %s90 = sadd.s32 %s89, 1
    %p93 = scmp.eq.s32.totalorder %s13, 1
    %p94 = scmp.ne.s32.totalorder %s89, %s91
    %p95 = scmp.eq.s32.totalorder %s13, 0
    %p96 = por %p94, %p95
    %p97 = scmp.ne.s32.totalorder %s89, %s91
    %p98 = scmp.eq.s32.totalorder %s18, 1
    %p99 = por %p97, %p98
    %p100 = scmp.ne.s32.totalorder %s91, %s92
    %p101 = scmp.eq.s32.totalorder %s18, 0
    %p102 = por %p100, %p101
    %p103 = scmp.ne.s32.totalorder %s91, %s92
    %p104 = scmp.eq.s32.totalorder %s19, 1
    %p105 = por %p103, %p104
    %p107 = scmp.ne.s32.totalorder %s92, %s106
    %p108 = scmp.eq.s32.totalorder %s19, 0
    %p109 = por %p107, %p108
    %s111 = sadd.s32 %s110, 1
    %p114 = scmp.eq.s32.totalorder %s13, 1
    %p115 = scmp.ne.s32.totalorder %s110, %s112
    %p116 = scmp.eq.s32.totalorder %s13, 0
    %p117 = por %p115, %p116
    %p118 = scmp.ne.s32.totalorder %s110, %s112
    %p119 = scmp.eq.s32.totalorder %s18, 1
    %p120 = por %p118, %p119
    %p121 = scmp.ne.s32.totalorder %s112, %s113
    %p122 = scmp.eq.s32.totalorder %s18, 0
    %p123 = por %p121, %p122
    %p124 = scmp.ne.s32.totalorder %s112, %s113
    %p125 = scmp.eq.s32.totalorder %s19, 1
    %p126 = por %p124, %p125
    %p128 = scmp.ne.s32.totalorder %s113, %s127
    %p129 = scmp.eq.s32.totalorder %s19, 0
    %p130 = por %p128, %p129
    %s131 = ssub.s32 %s13, %s20
    %p132 = scmp.eq.s32.totalorder %s131, 0
    %s134 = sadd.s32 %s133, 1
    %s135 = scalar_select %p132, %s133, %s134
    %p138 = pneg %p132
    %p139 = scmp.eq.s32.totalorder %s13, 1
    %p140 = por %p138, %p139
    %p141 = scmp.ne.s32.totalorder %s133, %s136
    %p142 = scmp.eq.s32.totalorder %s13, 0
    %p143 = por %p141, %p142
    %p144 = scmp.ne.s32.totalorder %s133, %s136
    %p145 = scmp.eq.s32.totalorder %s18, 1
    %p146 = por %p144, %p145
    %p147 = scmp.ne.s32.totalorder %s136, %s137
    %p148 = scmp.eq.s32.totalorder %s18, 0
    %p149 = por %p147, %p148
    %p150 = scmp.ne.s32.totalorder %s136, %s137
    %p151 = scmp.eq.s32.totalorder %s19, 1
    %p152 = por %p150, %p151
    %p154 = scmp.ne.s32.totalorder %s137, %s153
    %p155 = scmp.eq.s32.totalorder %s19, 0
    %p156 = por %p154, %p155
    %s157 = ssub.s32 %s13, %s20
    %p158 = scmp.eq.s32.totalorder %s157, 0
    %s160 = sadd.s32 %s159, 1
    %s161 = scalar_select %p158, %s159, %s160
    %p164 = pneg %p158
    %p165 = scmp.eq.s32.totalorder %s13, 1
    %p166 = por %p164, %p165
    %p167 = scmp.ne.s32.totalorder %s159, %s162
    %p168 = scmp.eq.s32.totalorder %s13, 0
    %p169 = por %p167, %p168
    %p170 = scmp.ne.s32.totalorder %s159, %s162
    %p171 = scmp.eq.s32.totalorder %s18, 1
    %p172 = por %p170, %p171
    %p173 = scmp.ne.s32.totalorder %s162, %s163
    %p174 = scmp.eq.s32.totalorder %s18, 0
    %p175 = por %p173, %p174
    %p176 = scmp.ne.s32.totalorder %s162, %s163
    %p177 = scmp.eq.s32.totalorder %s19, 1
    %p178 = por %p176, %p177
    %p180 = scmp.ne.s32.totalorder %s163, %s179
    %p181 = scmp.eq.s32.totalorder %s19, 0
    %p182 = por %p180, %p181
    %p183 = scmp.le.s32.totalorder 1, %s13
    %p184 = scmp.lt.s32.totalorder %s13, 3
    %p185 = pnand %p183, %p184
    %p186 = pneg %p185
    // Predicated region
    $region9: #{ood_mlp_forward.1} parent=5 // pred_check
      _
    $region10: #{ood_mlp_forward.1} parent=5 // pred_check_branch
      %188 = sbr.rel (%p185) target = $region12
    $region11: #{ood_mlp_forward.1} parent=5 // pred_region
      %s189 = ssub.s32 %s13, 1
      // Predicated region
      $region13: #{ood_mlp_forward.1} parent=11 // pred_check
        %p190 = pneg %p60
      $region14: #{ood_mlp_forward.1} parent=11 // pred_check_branch
        %192 = sbr.rel (%p190) target = $region16
      $region15: #{ood_mlp_forward.1} parent=11 // pred_region
        _
      $region16: #{ood_mlp_forward.1} parent=11 // pred_fallthru
        _
      // Predicated region
      $region17: #{ood_mlp_forward.1} parent=11 // pred_check
        %p193 = pneg %p81
      $region18: #{ood_mlp_forward.1} parent=11 // pred_check_branch
        %195 = sbr.rel (%p193) target = $region20
      $region19: #{ood_mlp_forward.1} parent=11 // pred_region
        _
      $region20: #{ood_mlp_forward.1} parent=11 // pred_fallthru
        _
      // Predicated region
      $region21: #{ood_mlp_forward.1} parent=11 // pred_check
        %p196 = pneg %p102
      $region22: #{ood_mlp_forward.1} parent=11 // pred_check_branch
        %198 = sbr.rel (%p196) target = $region24
      $region23: #{ood_mlp_forward.1} parent=11 // pred_region
        _
      $region24: #{ood_mlp_forward.1} parent=11 // pred_fallthru
        _
      // Predicated region
      $region25: #{ood_mlp_forward.1} parent=11 // pred_check
        %p199 = pneg %p123
      $region26: #{ood_mlp_forward.1} parent=11 // pred_check_branch
        %201 = sbr.rel (%p199) target = $region28
      $region27: #{ood_mlp_forward.1} parent=11 // pred_region
        _
      $region28: #{ood_mlp_forward.1} parent=11 // pred_fallthru
        _
    $region12: #{ood_mlp_forward.1} parent=5 // pred_fallthru
      _
    %p202 = scmp.lt.s32.totalorder %s13, 2
    // Predicated region
    $region29: #{ood_mlp_forward.1} parent=5 // pred_check
      %p203 = pneg %p202
    $region30: #{ood_mlp_forward.1} parent=5 // pred_check_branch
      %205 = sbr.rel (%p203) target = $region32
    $region31: #{ood_mlp_forward.1} parent=5 // pred_region
      // Predicated region
      $region33: #{ood_mlp_forward.1} parent=31 // pred_check
        %p206 = pneg %p33
      $region34: #{ood_mlp_forward.1} parent=31 // pred_check_branch
        %208 = sbr.rel (%p206) target = $region36
      $region35: #{ood_mlp_forward.1} parent=31 // pred_region
        %s209 = smul.u32 16, %s13
        %p210 = scmp.lt.s32.totalorder %s209, 31
        %s211 = scalar_select %p210, %s209, 31
        %s212 = smul.addr %s211, 8
        %s213 = scalar_lea.vmem %s0, %s212
        %s214 = smul.u32 16, %s13
      $region36: #{ood_mlp_forward.1} parent=31 // pred_fallthru
        _
    $region32: #{ood_mlp_forward.1} parent=5 // pred_fallthru
      _
    %p215 = scmp.le.s32.totalorder 1, %s13
    %p216 = scmp.lt.s32.totalorder %s13, 3
    %p217 = pnand %p215, %p216
    %p218 = pneg %p217
    // Predicated region
    $region37: #{ood_mlp_forward.1} parent=5 // pred_check
      _
    $region38: #{ood_mlp_forward.1} parent=5 // pred_check_branch
      %220 = sbr.rel (%p217) target = $region40
    $region39: #{ood_mlp_forward.1} parent=5 // pred_region
      %s221 = ssub.s32 %s13, 1
      %s222 = smul.u32 16, %s18
      %p223 = scmp.lt.s32.totalorder %s222, 31
      %s224 = scalar_select %p223, %s222, 31
      %s225 = smul.addr %s224, 8
      %s226 = scalar_lea.vmem %s0, %s225
      %p227 = pneg %p39
      %p228 = pneg %p36
      %p229 = pneg %p60
      %p230 = pneg %p57
      %p231 = pneg %p81
      %p232 = pneg %p78
      %p233 = pneg %p102
      %p234 = pneg %p99
      %p235 = pneg %p123
      %p236 = pneg %p120
      %p237 = pneg %p149
      %p238 = pneg %p146
      %s239 = smul.u32 16, %s18
      %p240 = scmp.lt.s32.totalorder %s239, 31
      %s241 = scalar_select %p240, %s239, 31
      %s242 = smul.addr %s241, 8
      %s243 = scalar_lea.vmem %s5, %s242
      %p244 = pneg %p175
      %p245 = pneg %p172
      %s246 = smul.u32 16, %s18
      %p247 = scmp.lt.s32.totalorder %s246, 31
      %s248 = scalar_select %p247, %s246, 31
      %s249 = smul.addr %s248, 8
      %s250 = scalar_lea.vmem %s6, %s249
      %s251 = smul.u32 16, %s18
      %p252 = scmp.lt.s32.totalorder %s251, 31
      %s253 = scalar_select %p252, %s251, 31
      %s254 = smul.addr %s253, 8
      %s255 = scalar_lea.vmem %s0, %s254
      %s256 = smul.u32 16, %s18
      %s257 = smul.u32 16, %s18
      %p258 = scmp.lt.s32.totalorder %s257, 31
      %s259 = scalar_select %p258, %s257, 31
      %s260 = smul.addr %s259, 8
      %s261 = scalar_lea.vmem %s5, %s260
      %s262 = smul.u32 16, %s18
      %s263 = smul.u32 16, %s18
      %p264 = scmp.lt.s32.totalorder %s263, 31
      %s265 = scalar_select %p264, %s263, 31
      %s266 = smul.addr %s265, 8
      %s267 = scalar_lea.vmem %s6, %s266
      %s268 = smul.u32 16, %s18
      %v269 = vld [vmem:[%s255] sm:$0xff]
      %v270 = vld [vmem:[%s255 + $0x8] sm:$0xff]
      %v271 = vld [vmem:[%s255 + $0x10] sm:$0xff]
      %v272 = vld [vmem:[%s255 + $0x18] sm:$0xff]
      %v273 = vld [vmem:[%s255 + $0x20] sm:$0xff]
      %v274 = vld [vmem:[%s255 + $0x28] sm:$0xff]
      %v275 = vld [vmem:[%s255 + $0x30] sm:$0xff]
      %v276 = vld [vmem:[%s255 + $0x38] sm:$0xff]
      %v277 = vld [vmem:[%s255 + $0x40] sm:$0xff]
      %v278 = vld [vmem:[%s255 + $0x48] sm:$0xff]
      %v279 = vld [vmem:[%s255 + $0x50] sm:$0xff]
      %v280 = vld [vmem:[%s255 + $0x58] sm:$0xff]
      %v281 = vld [vmem:[%s255 + $0x60] sm:$0xff]
      %v282 = vld [vmem:[%s255 + $0x68] sm:$0xff]
      %v283 = vld [vmem:[%s255 + $0x70] sm:$0xff]
      %v284 = vld [vmem:[%s255 + $0x78] sm:$0xff]
      %v285 = vld [vmem:[%s1] sm:$0xff]
      %v286 = vld [vmem:[%s1 + $0x8] sm:$0xff]
      %v287 = vld [vmem:[%s1 + $0x10] sm:$0xff]
      %v288 = vld [vmem:[%s1 + $0x18] sm:$0xff]
      %v289 = vld [vmem:[%s2] sm:$0x1]
      %v291 = vlaneseq
      %v292 = vshrl.u32 %v291, 7
      %v293 = vsub.s32 0, %v292
      %v294 = vrot.slane %v289, %v293
      %vm296 = vcmask 261120
      %v298 = vsel %vm296, %v269, 0
      %v301 = vsel %vm296, %v270, 0
      %v304 = vsel %vm296, %v271, 0
      %v307 = vsel %vm296, %v272, 0
      %v310 = vsel %vm296, %v273, 0
      %v313 = vsel %vm296, %v274, 0
      %v316 = vsel %vm296, %v275, 0
      %v319 = vsel %vm296, %v276, 0
      %v322 = vsel %vm296, %v277, 0
      %v325 = vsel %vm296, %v278, 0
      %v328 = vsel %vm296, %v279, 0
      %v331 = vsel %vm296, %v280, 0
      %v334 = vsel %vm296, %v281, 0
      %v337 = vsel %vm296, %v282, 0
      %v340 = vsel %vm296, %v283, 0
      %v343 = vsel %vm296, %v284, 0
      %345 = vmatprep.subr.mxu0 0.0
      %346 = vmatpush1.msra.mxu0 %v285
      %347 = vmatprep.subr.mxu0 0.0
      %348 = vmatpush1.msra.mxu0 %v286
      %349 = vmatprep.subr.mxu0 0.0
      %350 = vmatpush1.msra.mxu0 %v287
      %351 = vmatprep.subr.mxu0 0.0
      %352 = vmatpush1.msra.mxu0 %v288
      %353 = vmatprep.subr.mxu0 0.0
      %354 = vmatpush1.msra.mxu0 0.0
      %355 = vmatprep.subr.mxu0 0.0
      %356 = vmatpush1.msra.mxu0 0.0
      %357 = vmatprep.subr.mxu0 0.0
      %358 = vmatpush1.msra.mxu0 0.0
      %359 = vmatprep.subr.mxu0 0.0
      %360 = vmatpush1.msra.mxu0 0.0
      %361 = vmatprep.subr.mxu0 0.0
      %362 = vmatpush1.msra.mxu0 0.0
      %363 = vmatprep.subr.mxu0 0.0
      %364 = vmatpush1.msra.mxu0 0.0
      %365 = vmatprep.subr.mxu0 0.0
      %366 = vmatpush1.msra.mxu0 0.0
      %367 = vmatprep.subr.mxu0 0.0
      %368 = vmatpush1.msra.mxu0 0.0
      %369 = vmatprep.subr.mxu0 0.0
      %370 = vmatpush1.msra.mxu0 0.0
      %371 = vmatprep.subr.mxu0 0.0
      %372 = vmatpush1.msra.mxu0 0.0
      %373 = vmatprep.subr.mxu0 0.0
      %374 = vmatpush1.msra.mxu0 0.0
      %375 = vmatprep.subr.mxu0 0.0
      %376 = vmatpush1.msra.mxu0 0.0
      %377 = vmatprep.subr.mxu0 0.0
      %378 = vmatpush1.msra.mxu0 0.0
      %379 = vmatprep.subr.mxu0 0.0
      %380 = vmatpush1.msra.mxu0 0.0
      %381 = vmatprep.subr.mxu0 0.0
      %382 = vmatpush1.msra.mxu0 0.0
      %383 = vmatprep.subr.mxu0 0.0
      %384 = vmatpush1.msra.mxu0 0.0
      %385 = vmatprep.subr.mxu0 0.0
      %386 = vmatpush1.msra.mxu0 0.0
      %387 = vmatprep.subr.mxu0 0.0
      %388 = vmatpush1.msra.mxu0 0.0
      %389 = vmatprep.subr.mxu0 0.0
      %390 = vmatpush1.msra.mxu0 0.0
      %391 = vmatprep.subr.mxu0 0.0
      %392 = vmatpush1.msra.mxu0 0.0
      %393 = vmatprep.subr.mxu0 0.0
      %394 = vmatpush1.msra.mxu0 0.0
      %395 = vmatprep.subr.mxu0 0.0
      %396 = vmatpush1.msra.mxu0 0.0
      %397 = vmatprep.subr.mxu0 0.0
      %398 = vmatpush1.msra.mxu0 0.0
      %399 = vmatprep.subr.mxu0 0.0
      %400 = vmatpush1.msra.mxu0 0.0
      %401 = vmatprep.subr.mxu0 0.0
      %402 = vmatpush1.msra.mxu0 0.0
      %403 = vmatprep.subr.mxu0 0.0
      %404 = vmatpush1.msra.mxu0 0.0
      %405 = vmatprep.subr.mxu0 0.0
      %406 = vmatpush1.msra.mxu0 0.0
      %407 = vmatprep.subr.mxu0 0.0
      %408 = vmatpush1.msra.mxu0 0.0
      %409 = vmatprep.mubr.f32.mxu0 0.0
      %410 = vmatmul.mubr.f32.gmra.mrb[0].mxu0 %v298
      %v411 = vpop.f32.mrb[0].mxu0
      %v412 = vadd.f32 %v294, %v411
      %v413 = vpop.f32.mrb[0].mxu0
      %414 = vmatprep.mubr.f32.mxu0 0.0
      %415 = vmatmul.mubr.f32.gmra.mrb[0].mxu0 %v301
      %v416 = vpop.f32.mrb[0].mxu0
      %v417 = vadd.f32 %v294, %v416
      %v418 = vpop.f32.mrb[0].mxu0
      %419 = vmatprep.mubr.f32.mxu0 0.0
      %420 = vmatmul.mubr.f32.gmra.mrb[0].mxu0 %v304
      %v421 = vpop.f32.mrb[0].mxu0
      %v422 = vadd.f32 %v294, %v421
      %v423 = vpop.f32.mrb[0].mxu0
      %424 = vmatprep.mubr.f32.mxu0 0.0
      %425 = vmatmul.mubr.f32.gmra.mrb[0].mxu0 %v307
      %v426 = vpop.f32.mrb[0].mxu0
      %v427 = vadd.f32 %v294, %v426
      %v428 = vpop.f32.mrb[0].mxu0
      %429 = vmatprep.mubr.f32.mxu0 0.0
      %430 = vmatmul.mubr.f32.gmra.mrb[0].mxu0 %v310
      %v431 = vpop.f32.mrb[0].mxu0
      %v432 = vadd.f32 %v294, %v431
      %v433 = vpop.f32.mrb[0].mxu0
      %434 = vmatprep.mubr.f32.mxu0 0.0
      %435 = vmatmul.mubr.f32.gmra.mrb[0].mxu0 %v313
      %v436 = vpop.f32.mrb[0].mxu0
      %v437 = vadd.f32 %v294, %v436
      %v438 = vpop.f32.mrb[0].mxu0
      %439 = vmatprep.mubr.f32.mxu0 0.0
      %440 = vmatmul.mubr.f32.gmra.mrb[0].mxu0 %v316
      %v441 = vpop.f32.mrb[0].mxu0
      %v442 = vadd.f32 %v294, %v441
      %v443 = vpop.f32.mrb[0].mxu0
      %444 = vmatprep.mubr.f32.mxu0 0.0
      %445 = vmatmul.mubr.f32.gmra.mrb[0].mxu0 %v319
      %v446 = vpop.f32.mrb[0].mxu0
      %v447 = vadd.f32 %v294, %v446
      %v448 = vpop.f32.mrb[0].mxu0
      %449 = vmatprep.mubr.f32.mxu0 0.0
      %450 = vmatmul.mubr.f32.gmra.mrb[0].mxu0 %v322
      %v451 = vpop.f32.mrb[0].mxu0
      %v452 = vadd.f32 %v294, %v451
      %v453 = vpop.f32.mrb[0].mxu0
      %454 = vmatprep.mubr.f32.mxu0 0.0
      %455 = vmatmul.mubr.f32.gmra.mrb[0].mxu0 %v325
      %v456 = vpop.f32.mrb[0].mxu0
      %v457 = vadd.f32 %v294, %v456
      %v458 = vpop.f32.mrb[0].mxu0
      %459 = vmatprep.mubr.f32.mxu0 0.0
      %460 = vmatmul.mubr.f32.gmra.mrb[0].mxu0 %v328
      %v461 = vpop.f32.mrb[0].mxu0
      %v462 = vadd.f32 %v294, %v461
      %v463 = vpop.f32.mrb[0].mxu0
      %464 = vmatprep.mubr.f32.mxu0 0.0
      %465 = vmatmul.mubr.f32.gmra.mrb[0].mxu0 %v331
      %v466 = vpop.f32.mrb[0].mxu0
      %v467 = vadd.f32 %v294, %v466
      %v468 = vpop.f32.mrb[0].mxu0
      %469 = vmatprep.mubr.f32.mxu0 0.0
      %470 = vmatmul.mubr.f32.gmra.mrb[0].mxu0 %v334
      %v471 = vpop.f32.mrb[0].mxu0
      %v472 = vadd.f32 %v294, %v471
      %v473 = vpop.f32.mrb[0].mxu0
      %474 = vmatprep.mubr.f32.mxu0 0.0
      %475 = vmatmul.mubr.f32.gmra.mrb[0].mxu0 %v337
      %v476 = vpop.f32.mrb[0].mxu0
      %v477 = vadd.f32 %v294, %v476
      %v478 = vpop.f32.mrb[0].mxu0
      %479 = vmatprep.mubr.f32.mxu0 0.0
      %480 = vmatmul.mubr.f32.gmra.mrb[0].mxu0 %v340
      %v481 = vpop.f32.mrb[0].mxu0
      %v482 = vadd.f32 %v294, %v481
      %v483 = vpop.f32.mrb[0].mxu0
      %484 = vmatprep.mubr.f32.mxu0 0.0
      %485 = vmatmul.mubr.f32.gmra.mrb[0].mxu0 %v343
      %v486 = vpop.f32.mrb[0].mxu0
      %v487 = vadd.f32 %v294, %v486
      %v488 = vpop.f32.mrb[0].mxu0
      %489 = vdwg.mxu0
      %v490 = vmax.f32 %v412, 0.0
      %v491 = vmax.f32 %v417, 0.0
      %v492 = vmax.f32 %v422, 0.0
      %v493 = vmax.f32 %v427, 0.0
      %v494 = vmax.f32 %v432, 0.0
      %v495 = vmax.f32 %v437, 0.0
      %v496 = vmax.f32 %v442, 0.0
      %v497 = vmax.f32 %v447, 0.0
      %v498 = vmax.f32 %v452, 0.0
      %v499 = vmax.f32 %v457, 0.0
      %v500 = vmax.f32 %v462, 0.0
      %v501 = vmax.f32 %v467, 0.0
      %v502 = vmax.f32 %v472, 0.0
      %v503 = vmax.f32 %v477, 0.0
      %v504 = vmax.f32 %v482, 0.0
      %v505 = vmax.f32 %v487, 0.0
      %v506 = vld [vmem:[%s3] sm:$0xff]
      %v507 = vld [vmem:[%s3 + $0x8] sm:$0xff]
      %v508 = vld [vmem:[%s3 + $0x10] sm:$0xff]
      %v509 = vld [vmem:[%s3 + $0x18] sm:$0xff]
      %v510 = vld [vmem:[%s4] sm:$0x1]
      %v512 = vlaneseq
      %v513 = vshrl.u32 %v512, 7
      %v514 = vsub.s32 0, %v513
      %v515 = vrot.slane %v510, %v514
      %v518 = vsel %vm296, %v490, 0
      %v521 = vsel %vm296, %v491, 0
      %v524 = vsel %vm296, %v492, 0
      %v527 = vsel %vm296, %v493, 0
      %v530 = vsel %vm296, %v494, 0
      %v533 = vsel %vm296, %v495, 0
      %v536 = vsel %vm296, %v496, 0
      %v539 = vsel %vm296, %v497, 0
      %v542 = vsel %vm296, %v498, 0
      %v545 = vsel %vm296, %v499, 0
      %v548 = vsel %vm296, %v500, 0
      %v551 = vsel %vm296, %v501, 0
      %v554 = vsel %vm296, %v502, 0
      %v557 = vsel %vm296, %v503, 0
      %v560 = vsel %vm296, %v504, 0
      %v563 = vsel %vm296, %v505, 0
      %565 = vmatprep.subr.mxu0 0.0
      %566 = vmatpush1.msra.mxu0 %v506
      %567 = vmatprep.subr.mxu0 0.0
      %568 = vmatpush1.msra.mxu0 %v507
      %569 = vmatprep.subr.mxu0 0.0
      %570 = vmatpush1.msra.mxu0 %v508
      %571 = vmatprep.subr.mxu0 0.0
      %572 = vmatpush1.msra.mxu0 %v509
      %573 = vmatprep.subr.mxu0 0.0
      %574 = vmatpush1.msra.mxu0 0.0
      %575 = vmatprep.subr.mxu0 0.0
      %576 = vmatpush1.msra.mxu0 0.0
      %577 = vmatprep.subr.mxu0 0.0
      %578 = vmatpush1.msra.mxu0 0.0
      %579 = vmatprep.subr.mxu0 0.0
      %580 = vmatpush1.msra.mxu0 0.0
      %581 = vmatprep.subr.mxu0 0.0
      %582 = vmatpush1.msra.mxu0 0.0
      %583 = vmatprep.subr.mxu0 0.0
      %584 = vmatpush1.msra.mxu0 0.0
      %585 = vmatprep.subr.mxu0 0.0
      %586 = vmatpush1.msra.mxu0 0.0
      %587 = vmatprep.subr.mxu0 0.0
      %588 = vmatpush1.msra.mxu0 0.0
      %589 = vmatprep.subr.mxu0 0.0
      %590 = vmatpush1.msra.mxu0 0.0
      %591 = vmatprep.subr.mxu0 0.0
      %592 = vmatpush1.msra.mxu0 0.0
      %593 = vmatprep.subr.mxu0 0.0
      %594 = vmatpush1.msra.mxu0 0.0
      %595 = vmatprep.subr.mxu0 0.0
      %596 = vmatpush1.msra.mxu0 0.0
      %597 = vmatprep.subr.mxu0 0.0
      %598 = vmatpush1.msra.mxu0 0.0
      %599 = vmatprep.subr.mxu0 0.0
      %600 = vmatpush1.msra.mxu0 0.0
      %601 = vmatprep.subr.mxu0 0.0
      %602 = vmatpush1.msra.mxu0 0.0
      %603 = vmatprep.subr.mxu0 0.0
      %604 = vmatpush1.msra.mxu0 0.0
      %605 = vmatprep.subr.mxu0 0.0
      %606 = vmatpush1.msra.mxu0 0.0
      %607 = vmatprep.subr.mxu0 0.0
      %608 = vmatpush1.msra.mxu0 0.0
      %609 = vmatprep.subr.mxu0 0.0
      %610 = vmatpush1.msra.mxu0 0.0
      %611 = vmatprep.subr.mxu0 0.0
      %612 = vmatpush1.msra.mxu0 0.0
      %613 = vmatprep.subr.mxu0 0.0
      %614 = vmatpush1.msra.mxu0 0.0
      %615 = vmatprep.subr.mxu0 0.0
      %616 = vmatpush1.msra.mxu0 0.0
      %617 = vmatprep.subr.mxu0 0.0
      %618 = vmatpush1.msra.mxu0 0.0
      %619 = vmatprep.subr.mxu0 0.0
      %620 = vmatpush1.msra.mxu0 0.0
      %621 = vmatprep.subr.mxu0 0.0
      %622 = vmatpush1.msra.mxu0 0.0
      %623 = vmatprep.subr.mxu0 0.0
      %624 = vmatpush1.msra.mxu0 0.0
      %625 = vmatprep.subr.mxu0 0.0
      %626 = vmatpush1.msra.mxu0 0.0
      %627 = vmatprep.subr.mxu0 0.0
      %628 = vmatpush1.msra.mxu0 0.0
      %629 = vmatprep.mubr.f32.mxu0 0.0
      %630 = vmatmul.mubr.f32.gmra.mrb[0].mxu0 %v518
      %v631 = vpop.f32.mrb[0].mxu0
      %v632 = vadd.f32 %v515, %v631
      %v633 = vpop.f32.mrb[0].mxu0
      %634 = vmatprep.mubr.f32.mxu0 0.0
      %635 = vmatmul.mubr.f32.gmra.mrb[0].mxu0 %v521
      %v636 = vpop.f32.mrb[0].mxu0
      %v637 = vadd.f32 %v515, %v636
      %v638 = vpop.f32.mrb[0].mxu0
      %639 = vmatprep.mubr.f32.mxu0 0.0
      %640 = vmatmul.mubr.f32.gmra.mrb[0].mxu0 %v524
      %v641 = vpop.f32.mrb[0].mxu0
      %v642 = vadd.f32 %v515, %v641
      %v643 = vpop.f32.mrb[0].mxu0
      %644 = vmatprep.mubr.f32.mxu0 0.0
      %645 = vmatmul.mubr.f32.gmra.mrb[0].mxu0 %v527
      %v646 = vpop.f32.mrb[0].mxu0
      %v647 = vadd.f32 %v515, %v646
      %v648 = vpop.f32.mrb[0].mxu0
      %649 = vmatprep.mubr.f32.mxu0 0.0
      %650 = vmatmul.mubr.f32.gmra.mrb[0].mxu0 %v530
      %v651 = vpop.f32.mrb[0].mxu0
      %v652 = vadd.f32 %v515, %v651
      %v653 = vpop.f32.mrb[0].mxu0
      %654 = vmatprep.mubr.f32.mxu0 0.0
      %655 = vmatmul.mubr.f32.gmra.mrb[0].mxu0 %v533
      %v656 = vpop.f32.mrb[0].mxu0
      %v657 = vadd.f32 %v515, %v656
      %v658 = vpop.f32.mrb[0].mxu0
      %659 = vmatprep.mubr.f32.mxu0 0.0
      %660 = vmatmul.mubr.f32.gmra.mrb[0].mxu0 %v536
      %v661 = vpop.f32.mrb[0].mxu0
      %v662 = vadd.f32 %v515, %v661
      %v663 = vpop.f32.mrb[0].mxu0
      %664 = vmatprep.mubr.f32.mxu0 0.0
      %665 = vmatmul.mubr.f32.gmra.mrb[0].mxu0 %v539
      %v666 = vpop.f32.mrb[0].mxu0
      %v667 = vadd.f32 %v515, %v666
      %v668 = vpop.f32.mrb[0].mxu0
      %669 = vmatprep.mubr.f32.mxu0 0.0
      %670 = vmatmul.mubr.f32.gmra.mrb[0].mxu0 %v542
      %v671 = vpop.f32.mrb[0].mxu0
      %v672 = vadd.f32 %v515, %v671
      %v673 = vpop.f32.mrb[0].mxu0
      %674 = vmatprep.mubr.f32.mxu0 0.0
      %675 = vmatmul.mubr.f32.gmra.mrb[0].mxu0 %v545
      %v676 = vpop.f32.mrb[0].mxu0
      %v677 = vadd.f32 %v515, %v676
      %v678 = vpop.f32.mrb[0].mxu0
      %679 = vmatprep.mubr.f32.mxu0 0.0
      %680 = vmatmul.mubr.f32.gmra.mrb[0].mxu0 %v548
      %v681 = vpop.f32.mrb[0].mxu0
      %v682 = vadd.f32 %v515, %v681
      %v683 = vpop.f32.mrb[0].mxu0
      %684 = vmatprep.mubr.f32.mxu0 0.0
      %685 = vmatmul.mubr.f32.gmra.mrb[0].mxu0 %v551
      %v686 = vpop.f32.mrb[0].mxu0
      %v687 = vadd.f32 %v515, %v686
      %v688 = vpop.f32.mrb[0].mxu0
      %689 = vmatprep.mubr.f32.mxu0 0.0
      %690 = vmatmul.mubr.f32.gmra.mrb[0].mxu0 %v554
      %v691 = vpop.f32.mrb[0].mxu0
      %v692 = vadd.f32 %v515, %v691
      %v693 = vpop.f32.mrb[0].mxu0
      %694 = vmatprep.mubr.f32.mxu0 0.0
      %695 = vmatmul.mubr.f32.gmra.mrb[0].mxu0 %v557
      %v696 = vpop.f32.mrb[0].mxu0
      %v697 = vadd.f32 %v515, %v696
      %v698 = vpop.f32.mrb[0].mxu0
      %699 = vmatprep.mubr.f32.mxu0 0.0
      %700 = vmatmul.mubr.f32.gmra.mrb[0].mxu0 %v560
      %v701 = vpop.f32.mrb[0].mxu0
      %v702 = vadd.f32 %v515, %v701
      %v703 = vpop.f32.mrb[0].mxu0
      %704 = vmatprep.mubr.f32.mxu0 0.0
      %705 = vmatmul.mubr.f32.gmra.mrb[0].mxu0 %v563
      %v706 = vpop.f32.mrb[0].mxu0
      %v707 = vadd.f32 %v515, %v706
      %v708 = vpop.f32.mrb[0].mxu0
      %709 = vdwg.mxu0
      %vm710 = vcmask 130048
      %v711 = vsel %vm710, %v632, -inf
      %712 = vmax.xlane.f32.xlu0 %v711
      %v713 = vpop.xlane.xlu0 %712
      %v714 = vsel %vm710, %v637, -inf
      %715 = vmax.xlane.f32.xlu0 %v714
      %v716 = vpop.xlane.xlu0 %715
      %v717 = vsel %vm710, %v642, -inf
      %718 = vmax.xlane.f32.xlu0 %v717
      %v719 = vpop.xlane.xlu0 %718
      %v720 = vsel %vm710, %v647, -inf
      %721 = vmax.xlane.f32.xlu0 %v720
      %v722 = vpop.xlane.xlu0 %721
      %v723 = vsel %vm710, %v652, -inf
      %724 = vmax.xlane.f32.xlu0 %v723
      %v725 = vpop.xlane.xlu0 %724
      %v726 = vsel %vm710, %v657, -inf
      %727 = vmax.xlane.f32.xlu0 %v726
      %v728 = vpop.xlane.xlu0 %727
      %v729 = vsel %vm710, %v662, -inf
      %730 = vmax.xlane.f32.xlu0 %v729
      %v731 = vpop.xlane.xlu0 %730
      %v732 = vsel %vm710, %v667, -inf
      %733 = vmax.xlane.f32.xlu0 %v732
      %v734 = vpop.xlane.xlu0 %733
      %v735 = vsel %vm710, %v672, -inf
      %736 = vmax.xlane.f32.xlu0 %v735
      %v737 = vpop.xlane.xlu0 %736
      %v738 = vsel %vm710, %v677, -inf
      %739 = vmax.xlane.f32.xlu0 %v738
      %v740 = vpop.xlane.xlu0 %739
      %v741 = vsel %vm710, %v682, -inf
      %742 = vmax.xlane.f32.xlu0 %v741
      %v743 = vpop.xlane.xlu0 %742
      %v744 = vsel %vm710, %v687, -inf
      %745 = vmax.xlane.f32.xlu0 %v744
      %v746 = vpop.xlane.xlu0 %745
      %v747 = vsel %vm710, %v692, -inf
      %748 = vmax.xlane.f32.xlu0 %v747
      %v749 = vpop.xlane.xlu0 %748
      %v750 = vsel %vm710, %v697, -inf
      %751 = vmax.xlane.f32.xlu0 %v750
      %v752 = vpop.xlane.xlu0 %751
      %v753 = vsel %vm710, %v702, -inf
      %754 = vmax.xlane.f32.xlu0 %v753
      %v755 = vpop.xlane.xlu0 %754
      %v756 = vsel %vm710, %v707, -inf
      %757 = vmax.xlane.f32.xlu0 %v756
      %v758 = vpop.xlane.xlu0 %757
      %v759 = vsub.f32 %v632, %v713
      %v760 = vsub.f32 %v637, %v716
      %v761 = vsub.f32 %v642, %v719
      %v762 = vsub.f32 %v647, %v722
      %v763 = vsub.f32 %v652, %v725
      %v764 = vsub.f32 %v657, %v728
      %v765 = vsub.f32 %v662, %v731
      %v766 = vsub.f32 %v667, %v734
      %v767 = vsub.f32 %v672, %v737
      %v768 = vsub.f32 %v677, %v740
      %v769 = vsub.f32 %v682, %v743
      %v770 = vsub.f32 %v687, %v746
      %v771 = vsub.f32 %v692, %v749
      %v772 = vsub.f32 %v697, %v752
      %v773 = vsub.f32 %v702, %v755
      %v774 = vsub.f32 %v707, %v758
      %v775 = vmul.f32 %v759, 1.442695
      %v776 = vpow.pop %v775
      %v777 = vmul.f32 %v760, 1.442695
      %v778 = vpow.pop %v777
      %v779 = vmul.f32 %v761, 1.442695
      %v780 = vpow.pop %v779
      %v781 = vmul.f32 %v762, 1.442695
      %v782 = vpow.pop %v781
      %v783 = vmul.f32 %v763, 1.442695
      %v784 = vpow.pop %v783
      %v785 = vmul.f32 %v764, 1.442695
      %v786 = vpow.pop %v785
      %v787 = vmul.f32 %v765, 1.442695
      %v788 = vpow.pop %v787
      %v789 = vmul.f32 %v766, 1.442695
      %v790 = vpow.pop %v789
      %v791 = vmul.f32 %v767, 1.442695
      %v792 = vpow.pop %v791
      %v793 = vmul.f32 %v768, 1.442695
      %v794 = vpow.pop %v793
      %v795 = vmul.f32 %v769, 1.442695
      %v796 = vpow.pop %v795
      %v797 = vmul.f32 %v770, 1.442695
      %v798 = vpow.pop %v797
      %v799 = vmul.f32 %v771, 1.442695
      %v800 = vpow.pop %v799
      %v801 = vmul.f32 %v772, 1.442695
      %v802 = vpow.pop %v801
      %v803 = vmul.f32 %v773, 1.442695
      %v804 = vpow.pop %v803
      %v805 = vmul.f32 %v774, 1.442695
      %v806 = vpow.pop %v805
      %v807 = vsel %vm710, %v776, 0.0
      %808 = vadd.xlane.f32.xlu0 %v807
      %v809 = vpop.xlane.xlu0 %808
      %v810 = vsel %vm710, %v778, 0.0
      %811 = vadd.xlane.f32.xlu0 %v810
      %v812 = vpop.xlane.xlu0 %811
      %v813 = vsel %vm710, %v780, 0.0
      %814 = vadd.xlane.f32.xlu0 %v813
      %v815 = vpop.xlane.xlu0 %814
      %v816 = vsel %vm710, %v782, 0.0
      %817 = vadd.xlane.f32.xlu0 %v816
      %v818 = vpop.xlane.xlu0 %817
      %v819 = vsel %vm710, %v784, 0.0
      %820 = vadd.xlane.f32.xlu0 %v819
      %v821 = vpop.xlane.xlu0 %820
      %v822 = vsel %vm710, %v786, 0.0
      %823 = vadd.xlane.f32.xlu0 %v822
      %v824 = vpop.xlane.xlu0 %823
      %v825 = vsel %vm710, %v788, 0.0
      %826 = vadd.xlane.f32.xlu0 %v825
      %v827 = vpop.xlane.xlu0 %826
      %v828 = vsel %vm710, %v790, 0.0
      %829 = vadd.xlane.f32.xlu0 %v828
      %v830 = vpop.xlane.xlu0 %829
      %v831 = vsel %vm710, %v792, 0.0
      %832 = vadd.xlane.f32.xlu0 %v831
      %v833 = vpop.xlane.xlu0 %832
      %v834 = vsel %vm710, %v794, 0.0
      %835 = vadd.xlane.f32.xlu0 %v834
      %v836 = vpop.xlane.xlu0 %835
      %v837 = vsel %vm710, %v796, 0.0
      %838 = vadd.xlane.f32.xlu0 %v837
      %v839 = vpop.xlane.xlu0 %838
      %v840 = vsel %vm710, %v798, 0.0
      %841 = vadd.xlane.f32.xlu0 %v840
      %v842 = vpop.xlane.xlu0 %841
      %v843 = vsel %vm710, %v800, 0.0
      %844 = vadd.xlane.f32.xlu0 %v843
      %v845 = vpop.xlane.xlu0 %844
      %v846 = vsel %vm710, %v802, 0.0
      %847 = vadd.xlane.f32.xlu0 %v846
      %v848 = vpop.xlane.xlu0 %847
      %v849 = vsel %vm710, %v804, 0.0
      %850 = vadd.xlane.f32.xlu0 %v849
      %v851 = vpop.xlane.xlu0 %850
      %v852 = vsel %vm710, %v806, 0.0
      %853 = vadd.xlane.f32.xlu0 %v852
      %v854 = vpop.xlane.xlu0 %853
      %v855 = vlog2.pop %v809
      %v856 = vmul.f32 %v855, 0.6931472
      %v857 = vlog2.pop %v812
      %v858 = vmul.f32 %v857, 0.6931472
      %v859 = vlog2.pop %v815
      %v860 = vmul.f32 %v859, 0.6931472
      %v861 = vlog2.pop %v818
      %v862 = vmul.f32 %v861, 0.6931472
      %v863 = vlog2.pop %v821
      %v864 = vmul.f32 %v863, 0.6931472
      %v865 = vlog2.pop %v824
      %v866 = vmul.f32 %v865, 0.6931472
      %v867 = vlog2.pop %v827
      %v868 = vmul.f32 %v867, 0.6931472
      %v869 = vlog2.pop %v830
      %v870 = vmul.f32 %v869, 0.6931472
      %v871 = vlog2.pop %v833
      %v872 = vmul.f32 %v871, 0.6931472
      %v873 = vlog2.pop %v836
      %v874 = vmul.f32 %v873, 0.6931472
      %v875 = vlog2.pop %v839
      %v876 = vmul.f32 %v875, 0.6931472
      %v877 = vlog2.pop %v842
      %v878 = vmul.f32 %v877, 0.6931472
      %v879 = vlog2.pop %v845
      %v880 = vmul.f32 %v879, 0.6931472
      %v881 = vlog2.pop %v848
      %v882 = vmul.f32 %v881, 0.6931472
      %v883 = vlog2.pop %v851
      %v884 = vmul.f32 %v883, 0.6931472
      %v885 = vlog2.pop %v854
      %v886 = vmul.f32 %v885, 0.6931472
      %v887 = vsub.f32 %v759, %v856
      %v888 = vsub.f32 %v760, %v858
      %v889 = vsub.f32 %v761, %v860
      %v890 = vsub.f32 %v762, %v862
      %v891 = vsub.f32 %v763, %v864
      %v892 = vsub.f32 %v764, %v866
      %v893 = vsub.f32 %v765, %v868
      %v894 = vsub.f32 %v766, %v870
      %v895 = vsub.f32 %v767, %v872
      %v896 = vsub.f32 %v768, %v874
      %v897 = vsub.f32 %v769, %v876
      %v898 = vsub.f32 %v770, %v878
      %v899 = vsub.f32 %v771, %v880
      %v900 = vsub.f32 %v772, %v882
      %v901 = vsub.f32 %v773, %v884
      %v902 = vsub.f32 %v774, %v886
      %903 = vst.msk [vmem:[%s261] sm:$0xff] %vm710, %v887
      %904 = vst.msk [vmem:[%s261 + $0x8] sm:$0xff] %vm710, %v888
      %905 = vst.msk [vmem:[%s261 + $0x10] sm:$0xff] %vm710, %v889
      %906 = vst.msk [vmem:[%s261 + $0x18] sm:$0xff] %vm710, %v890
      %907 = vst.msk [vmem:[%s261 + $0x20] sm:$0xff] %vm710, %v891
      %908 = vst.msk [vmem:[%s261 + $0x28] sm:$0xff] %vm710, %v892
      %909 = vst.msk [vmem:[%s261 + $0x30] sm:$0xff] %vm710, %v893
      %910 = vst.msk [vmem:[%s261 + $0x38] sm:$0xff] %vm710, %v894
      %911 = vst.msk [vmem:[%s261 + $0x40] sm:$0xff] %vm710, %v895
      %912 = vst.msk [vmem:[%s261 + $0x48] sm:$0xff] %vm710, %v896
      %913 = vst.msk [vmem:[%s261 + $0x50] sm:$0xff] %vm710, %v897
      %914 = vst.msk [vmem:[%s261 + $0x58] sm:$0xff] %vm710, %v898
      %915 = vst.msk [vmem:[%s261 + $0x60] sm:$0xff] %vm710, %v899
      %916 = vst.msk [vmem:[%s261 + $0x68] sm:$0xff] %vm710, %v900
      %917 = vst.msk [vmem:[%s261 + $0x70] sm:$0xff] %vm710, %v901
      %918 = vst.msk [vmem:[%s261 + $0x78] sm:$0xff] %vm710, %v902
      %919 = vst.msk [vmem:[%s267] sm:$0xff] %vm710, %v632
      %920 = vst.msk [vmem:[%s267 + $0x8] sm:$0xff] %vm710, %v637
      %921 = vst.msk [vmem:[%s267 + $0x10] sm:$0xff] %vm710, %v642
      %922 = vst.msk [vmem:[%s267 + $0x18] sm:$0xff] %vm710, %v647
      %923 = vst.msk [vmem:[%s267 + $0x20] sm:$0xff] %vm710, %v652
      %924 = vst.msk [vmem:[%s267 + $0x28] sm:$0xff] %vm710, %v657
      %925 = vst.msk [vmem:[%s267 + $0x30] sm:$0xff] %vm710, %v662
      %926 = vst.msk [vmem:[%s267 + $0x38] sm:$0xff] %vm710, %v667
      %927 = vst.msk [vmem:[%s267 + $0x40] sm:$0xff] %vm710, %v672
      %928 = vst.msk [vmem:[%s267 + $0x48] sm:$0xff] %vm710, %v677
      %929 = vst.msk [vmem:[%s267 + $0x50] sm:$0xff] %vm710, %v682
      %930 = vst.msk [vmem:[%s267 + $0x58] sm:$0xff] %vm710, %v687
      %931 = vst.msk [vmem:[%s267 + $0x60] sm:$0xff] %vm710, %v692
      %932 = vst.msk [vmem:[%s267 + $0x68] sm:$0xff] %vm710, %v697
      %933 = vst.msk [vmem:[%s267 + $0x70] sm:$0xff] %vm710, %v702
      %934 = vst.msk [vmem:[%s267 + $0x78] sm:$0xff] %vm710, %v707
      %s935 = smul.u32 16, %s18
      %p936 = scmp.lt.s32.totalorder %s935, 31
      %s937 = scalar_select %p936, %s935, 31
      %s938 = smul.addr %s937, 8
      %s939 = scalar_lea.vmem %s5, %s938
      %s940 = smul.u32 16, %s18
      %p941 = scmp.lt.s32.totalorder %s940, 31
      %s942 = scalar_select %p941, %s940, 31
      %s943 = smul.addr %s942, 8
      %s944 = scalar_lea.vmem %s6, %s943
      // Predicated region
      $region41: #{ood_mlp_forward.1} parent=39 // pred_check
        %p945 = pneg %p146
      $region42: #{ood_mlp_forward.1} parent=39 // pred_check_branch
        %947 = sbr.rel (%p945) target = $region44
      $region43: #{ood_mlp_forward.1} parent=39 // pred_region
        %s948 = smul.u32 16, %s18
      $region44: #{ood_mlp_forward.1} parent=39 // pred_fallthru
        _
      // Predicated region
      $region45: #{ood_mlp_forward.1} parent=39 // pred_check
        %p949 = pneg %p172
      $region46: #{ood_mlp_forward.1} parent=39 // pred_check_branch
        %951 = sbr.rel (%p949) target = $region48
      $region47: #{ood_mlp_forward.1} parent=39 // pred_region
        %s952 = smul.u32 16, %s18
      $region48: #{ood_mlp_forward.1} parent=39 // pred_fallthru
        _
    $region40: #{ood_mlp_forward.1} parent=5 // pred_fallthru
      _
    %p953 = scmp.le.s32.totalorder 2, %s13
    // Predicated region
    $region49: #{ood_mlp_forward.1} parent=5 // pred_check
      %p954 = pneg %p953
    $region50: #{ood_mlp_forward.1} parent=5 // pred_check_branch
      %956 = sbr.rel (%p954) target = $region52
    $region51: #{ood_mlp_forward.1} parent=5 // pred_region
      %s957 = ssub.s32 %s13, 2
      // Predicated region
      $region53: #{ood_mlp_forward.1} parent=51 // pred_check
        %p958 = pneg %p152
      $region54: #{ood_mlp_forward.1} parent=51 // pred_check_branch
        %960 = sbr.rel (%p958) target = $region56
      $region55: #{ood_mlp_forward.1} parent=51 // pred_region
        %s961 = smul.u32 16, %s19
        %p962 = scmp.lt.s32.totalorder %s961, 31
        %s963 = scalar_select %p962, %s961, 31
        %s964 = smul.addr %s963, 8
        %s965 = scalar_lea.vmem %s5, %s964
      $region56: #{ood_mlp_forward.1} parent=51 // pred_fallthru
        _
      // Predicated region
      $region57: #{ood_mlp_forward.1} parent=51 // pred_check
        %p966 = pneg %p178
      $region58: #{ood_mlp_forward.1} parent=51 // pred_check_branch
        %968 = sbr.rel (%p966) target = $region60
      $region59: #{ood_mlp_forward.1} parent=51 // pred_region
        %s969 = smul.u32 16, %s19
        %p970 = scmp.lt.s32.totalorder %s969, 31
        %s971 = scalar_select %p970, %s969, 31
        %s972 = smul.addr %s971, 8
        %s973 = scalar_lea.vmem %s6, %s972
      $region60: #{ood_mlp_forward.1} parent=51 // pred_fallthru
        _
    $region52: #{ood_mlp_forward.1} parent=5 // pred_fallthru
      _
  $region6: #{ood_mlp_forward.1} parent=0 // loop_footer
    %s17 = sadd.s32 1, %s13
  $region7: #{ood_mlp_forward.1} parent=0 // loop_footer_branch
    %12 = sbr.rel target = $region3
  $region8: #{ood_mlp_forward.1} parent=0 // loop_exit
    _

</llo_original>
